<compile_context>
chip_gen: v7x
topology: tpu7x:2x2x1
jax: 0.10.0
libtpu: 0.0.40
codegen_flags: <defaults>
</compile_context>

<pallas_src>
import functools
import math

import jax
import jax.numpy as jnp
from jax.experimental import pallas as pl
from jax.experimental.pallas import tpu as pltpu


def _sdpa_kernel(q_ref, k_ref, v_ref, o_ref, p_ref, *, scale, precision):
    q = q_ref[0] * scale                       # (tq, d_k), scale folded into Q
    k = k_ref[0]                               # (S_k, d_k), native dtype -> MXU
    v = v_ref[0]                               # (S_k, d_v), native dtype -> MXU
    # scores = (Q/sqrt(d_k)) K^T, f32 accumulation on the MXU.
    s = jax.lax.dot_general(
        q, k, dimension_numbers=(((1,), (1,)), ((), ())),
        precision=precision, preferred_element_type=jnp.float32)   # (tq, S_k) f32
    s_max = jnp.max(s, axis=-1, keepdims=True)
    e = jnp.exp(s - s_max)
    inv = pl.reciprocal(jnp.sum(e, axis=-1, keepdims=True), approx=False)  # (tq, 1)
    p = e * inv
    o = jnp.dot(p.astype(v.dtype), v,
                precision=precision, preferred_element_type=jnp.float32)
    o_ref[0] = o.astype(o_ref.dtype)
    p_ref[0] = p.astype(p_ref.dtype)


def _sdpa_kernel_masked(q_ref, k_ref, v_ref, m_ref, o_ref, p_ref, *, scale, precision):
    q = q_ref[0] * scale
    k = k_ref[0]
    v = v_ref[0]
    s = jax.lax.dot_general(
        q, k, dimension_numbers=(((1,), (1,)), ((), ())),
        precision=precision, preferred_element_type=jnp.float32)
    # masked_fill(mask == False, -1e9)
    s = jnp.where(m_ref[0] != 0, s, jnp.float32(-1e9))
    s_max = jnp.max(s, axis=-1, keepdims=True)
    e = jnp.exp(s - s_max)
    inv = pl.reciprocal(jnp.sum(e, axis=-1, keepdims=True), approx=False)
    p = e * inv
    o = jnp.dot(p.astype(v.dtype), v,
                precision=precision, preferred_element_type=jnp.float32)
    o_ref[0] = o.astype(o_ref.dtype)
    p_ref[0] = p.astype(p_ref.dtype)


def _pick_tq(S_q: int, S_k: int) -> int:
    """Query-tile size: full extent for short queries, otherwise bounded by the
    live (tq, S_k) f32 score slab so we stay out of the spill-bound regime."""
    if S_q <= 128:
        return S_q                    # full-extent block always satisfies (8,128)
    if S_k <= 512:
        return 256                    # fat tiles: amortize per-grid-step overhead
    if S_k <= 1024:
        return 128
    return 64


def scaled_dot_product_attention(query, key, value, mask=None):
    """Pallas equivalent of the PyTorch ScaledDotProductAttention.forward().

    query: (..., S_q, d_k), key: (..., S_k, d_k), value: (..., S_k, d_v)
    mask (optional): broadcastable to (..., S_q, S_k); True/nonzero = keep.
    Returns (context (..., S_q, d_v), p_attn (..., S_q, S_k)) in the input dtype.
    """
    *lead, S_q, d_k = query.shape
    lead = tuple(lead)
    S_k = key.shape[-2]
    d_v = value.shape[-1]
    BH = math.prod(lead) if lead else 1
    scale = 1.0 / math.sqrt(float(d_k))
    in_dtype = query.dtype
    precision = (jax.lax.Precision.HIGHEST
                 if jnp.dtype(in_dtype) == jnp.dtype(jnp.float32)
                 else jax.lax.Precision.DEFAULT)

    q = query.reshape(BH, S_q, d_k)
    k = key.reshape(BH, S_k, d_k)
    v = value.reshape(BH, S_k, d_v)

    # Query tiling with padded tail (padded rows are computed then discarded).
    tq = _pick_tq(S_q, S_k)
    n_q = pl.cdiv(S_q, tq)
    S_qp = n_q * tq
    pad_q = S_qp - S_q
    if pad_q:
        q = jnp.pad(q, ((0, 0), (0, pad_q), (0, 0)))

    grid = (BH, n_q)
    q_spec = pl.BlockSpec((1, tq, d_k), lambda b, i: (b, i, 0))
    k_spec = pl.BlockSpec((1, S_k, d_k), lambda b, i: (b, 0, 0))
    v_spec = pl.BlockSpec((1, S_k, d_v), lambda b, i: (b, 0, 0))
    o_spec = pl.BlockSpec((1, tq, d_v), lambda b, i: (b, i, 0))
    p_spec = pl.BlockSpec((1, tq, S_k), lambda b, i: (b, i, 0))

    out_shape = (
        jax.ShapeDtypeStruct((BH, S_qp, d_v), in_dtype),
        jax.ShapeDtypeStruct((BH, S_qp, S_k), in_dtype),   # p_attn in input dtype (torch parity)
    )

    mask_block_bytes = 0
    if mask is None:
        kernel = functools.partial(_sdpa_kernel, scale=scale, precision=precision)
        in_specs = [q_spec, k_spec, v_spec]
        args = (q, k, v)
    else:
        m = jnp.asarray(mask)
        # Broadcast only over the (query, key) dims; keep leading dims minimal.
        if m.ndim < 2:
            m = jnp.broadcast_to(m, (S_q, S_k))
        else:
            m = jnp.broadcast_to(m, m.shape[:-2] + (S_q, S_k))
        if m.ndim == 2 or all(d == 1 for d in m.shape[:-2]):
            # Mask shared across batch/heads: keep a single copy in HBM.
            m = m.reshape(1, S_q, S_k)
            m_map = lambda b, i: (0, i, 0)
        else:
            m = jnp.broadcast_to(m, lead + (S_q, S_k)).reshape(BH, S_q, S_k)
            m_map = lambda b, i: (b, i, 0)
        m = (m != 0).astype(jnp.int8)          # 1 byte/elem instead of int32
        if pad_q:
            m = jnp.pad(m, ((0, 0), (0, pad_q), (0, 0)), constant_values=1)
        m_spec = pl.BlockSpec((1, tq, S_k), m_map)
        kernel = functools.partial(_sdpa_kernel_masked, scale=scale, precision=precision)
        in_specs = [q_spec, k_spec, v_spec, m_spec]
        args = (q, k, v, m)
        mask_block_bytes = tq * S_k

    # VMEM working-set estimate (double-buffered blocks); raise the scoped limit
    # only when the defaults would be tight.
    itemsize = jnp.dtype(in_dtype).itemsize
    block_bytes = (tq * d_k + S_k * d_k + S_k * d_v + tq * d_v + tq * S_k) * itemsize
    block_bytes += mask_block_bytes
    vmem_needed = 2 * block_bytes + (4 << 20)        # + headroom for f32 temps / spill
    cp_kwargs = dict(dimension_semantics=("parallel", "parallel"))
    if vmem_needed > (14 << 20):
        cp_kwargs["vmem_limit_bytes"] = int(min(vmem_needed, 100 << 20))
    compiler_params = pltpu.CompilerParams(**cp_kwargs)

    out, p_attn = pl.pallas_call(
        kernel,
        out_shape=out_shape,
        grid=grid,
        in_specs=in_specs,
        out_specs=(o_spec, p_spec),
        compiler_params=compiler_params,
    )(*args)

    if pad_q:
        out = out[:, :S_q]
        p_attn = p_attn[:, :S_q]
    return (out.reshape(lead + (S_q, d_v)),
            p_attn.reshape(lead + (S_q, S_k)))


def _reference(q, k, v, mask=None):
    scale = 1.0 / math.sqrt(float(q.shape[-1]))
    scores = jnp.einsum("...qd,...kd->...qk", q, k,
                        precision=jax.lax.Precision.HIGHEST) * scale
    if mask is not None:
        scores = jnp.where(mask, scores, -1e9)
    p = jax.nn.softmax(scores, axis=-1)
    out = jnp.einsum("...qk,...kd->...qd", p, v,
                     precision=jax.lax.Precision.HIGHEST)
    return out, p


if __name__ == "__main__":
    # Small deterministic setup: batch=2, heads=2, seq=8, d_k=d_v=32.
    B, H, S, D = 2, 2, 8, 32
    key0 = jax.random.PRNGKey(0)
    kq, kk, kv = jax.random.split(key0, 3)
    q = jax.random.normal(kq, (B, H, S, D), dtype=jnp.float32)
    k = jax.random.normal(kk, (B, H, S, D), dtype=jnp.float32)
    v = jax.random.normal(kv, (B, H, S, D), dtype=jnp.float32)

    # Unmasked attention.
    out, p = scaled_dot_product_attention(q, k, v)
    out = jax.block_until_ready(out)
    p = jax.block_until_ready(p)
    out_ref, p_ref = _reference(q, k, v)
    assert out.shape == (B, H, S, D) and p.shape == (B, H, S, S)
    assert jnp.allclose(out, out_ref, atol=1e-4, rtol=1e-4)
    assert jnp.allclose(p, p_ref, atol=1e-4, rtol=1e-4)

    # Masked (causal boolean mask, broadcast over batch/heads like torch).
    mask = jnp.tril(jnp.ones((S, S), dtype=bool))
    out_m, p_m = scaled_dot_product_attention(q, k, v, mask=mask)
    out_m = jax.block_until_ready(out_m)
    p_m = jax.block_until_ready(p_m)
    out_mref, p_mref = _reference(q, k, v, mask=mask)
    assert jnp.allclose(out_m, out_mref, atol=1e-4, rtol=1e-4)
    assert jnp.allclose(p_m, p_mref, atol=1e-4, rtol=1e-4)

    # Non-tile-divisible query length exercises the cdiv/padded-tail path.
    kq2, kk2, kv2 = jax.random.split(jax.random.PRNGKey(0), 3)
    q2 = jax.random.normal(kq2, (1, 2, 200, D), dtype=jnp.float32)
    k2 = jax.random.normal(kk2, (1, 2, 160, D), dtype=jnp.float32)
    v2 = jax.random.normal(kv2, (1, 2, 160, D), dtype=jnp.float32)
    out2, p2 = scaled_dot_product_attention(q2, k2, v2)
    out2 = jax.block_until_ready(out2)
    p2 = jax.block_until_ready(p2)
    out2_ref, p2_ref = _reference(q2, k2, v2)
    assert out2.shape == (1, 2, 200, D) and p2.shape == (1, 2, 200, 160)
    assert jnp.allclose(out2, out2_ref, atol=1e-4, rtol=1e-4)
    assert jnp.allclose(p2, p2_ref, atol=1e-4, rtol=1e-4)

    print("KERNEL_OK")
</pallas_src>

<mosaic_0001>
module attributes {stable_mosaic.version = 11 : i64} {
  func.func @_sdpa_kernel(%arg0: i32, %arg1: i32, %arg2: memref<1x8x32xf32, #tpu.memory_space<vmem>>, %arg3: memref<1x8x32xf32, #tpu.memory_space<vmem>>, %arg4: memref<1x8x32xf32, #tpu.memory_space<vmem>>, %arg5: memref<1x8x32xf32, #tpu.memory_space<vmem>>, %arg6: memref<1x8x8xf32, #tpu.memory_space<vmem>>) attributes {dimension_semantics = [#tpu.dimension_semantics<parallel>, #tpu.dimension_semantics<parallel>], iteration_bounds = array<i64: 4, 1>, scalar_prefetch = 0 : i64, scratch_operands = 0 : i64, tpu.core_type = #tpu.core_type<tc>, window_params = [{transform_indices = @transform_0, window_bounds = array<i64: 1, 8, 32>}, {transform_indices = @transform_1, window_bounds = array<i64: 1, 8, 32>}, {transform_indices = @transform_2, window_bounds = array<i64: 1, 8, 32>}, {transform_indices = @transform_3, window_bounds = array<i64: 1, 8, 32>}, {transform_indices = @transform_4, window_bounds = array<i64: 1, 8, 8>}]} {
    %c0 = arith.constant 0 : index
    %c0_0 = arith.constant 0 : index
    %c0_1 = arith.constant 0 : index
    %0 = vector.load %arg2[%c0, %c0_0, %c0_1] : memref<1x8x32xf32, #tpu.memory_space<vmem>>, vector<1x8x32xf32>
    %1 = vector.shape_cast %0 : vector<1x8x32xf32> to vector<8x32xf32>
    %cst = arith.constant 0.176776692 : f32
    %2 = vector.broadcast %cst : f32 to vector<8x32xf32>
    %3 = arith.mulf %1, %2 : vector<8x32xf32>
    %c0_2 = arith.constant 0 : index
    %c0_3 = arith.constant 0 : index
    %c0_4 = arith.constant 0 : index
    %4 = vector.load %arg3[%c0_2, %c0_3, %c0_4] : memref<1x8x32xf32, #tpu.memory_space<vmem>>, vector<1x8x32xf32>
    %5 = vector.shape_cast %4 : vector<1x8x32xf32> to vector<8x32xf32>
    %c0_5 = arith.constant 0 : index
    %c0_6 = arith.constant 0 : index
    %c0_7 = arith.constant 0 : index
    %6 = vector.load %arg4[%c0_5, %c0_6, %c0_7] : memref<1x8x32xf32, #tpu.memory_space<vmem>>, vector<1x8x32xf32>
    %7 = vector.shape_cast %6 : vector<1x8x32xf32> to vector<8x32xf32>
    %cst_8 = arith.constant dense<0.000000e+00> : vector<8x8xf32>
    %8 = tpu.matmul %3, %5, %cst_8 {dimension_numbers = #tpu.dot_dimension_numbers<[1], [1], [0], [0], [0, 0, 1, 0], [], []>, precision = #tpu.contract_precision<fp32>} : vector<8x32xf32>, vector<8x32xf32>, vector<8x8xf32> -> vector<8x8xf32>
    %cst_9 = arith.constant dense<0xFF800000> : vector<8xf32>
    %9 = vector.multi_reduction <maximumf>, %8, %cst_9 [1] : vector<8x8xf32> to vector<8xf32>
    %10 = vector.shape_cast %9 : vector<8xf32> to vector<8x1xf32>
    %11 = vector.broadcast %10 : vector<8x1xf32> to vector<8x8xf32>
    %12 = arith.subf %8, %11 : vector<8x8xf32>
    %13 = math.exp %12 : vector<8x8xf32>
    %cst_10 = arith.constant dense<0.000000e+00> : vector<8xf32>
    %14 = vector.multi_reduction <add>, %13, %cst_10 [1] : vector<8x8xf32> to vector<8xf32>
    %15 = vector.shape_cast %14 : vector<8xf32> to vector<8x1xf32>
    %16 = tpu.reciprocal %15 : vector<8x1xf32> -> vector<8x1xf32>
    %17 = vector.broadcast %16 : vector<8x1xf32> to vector<8x8xf32>
    %18 = arith.mulf %13, %17 : vector<8x8xf32>
    %cst_11 = arith.constant dense<0.000000e+00> : vector<8x32xf32>
    %19 = tpu.matmul %18, %7, %cst_11 {dimension_numbers = #tpu.dot_dimension_numbers<[1], [0], [0], [1], [0, 0, 1, 1], [], []>, precision = #tpu.contract_precision<fp32>} : vector<8x8xf32>, vector<8x32xf32>, vector<8x32xf32> -> vector<8x32xf32>
    %c0_12 = arith.constant 0 : index
    %c0_13 = arith.constant 0 : index
    %c0_14 = arith.constant 0 : index
    %20 = vector.load %arg5[%c0_12, %c0_13, %c0_14] : memref<1x8x32xf32, #tpu.memory_space<vmem>>, vector<1x8x32xf32>
    %21 = vector.shape_cast %20 : vector<1x8x32xf32> to vector<8x32xf32>
    %22 = vector.shape_cast %19 : vector<8x32xf32> to vector<1x8x32xf32>
    tpu.vector_store %arg5[%c0_12, %c0_13, %c0_14], %22 {strides = array<i32>} : memref<1x8x32xf32, #tpu.memory_space<vmem>>, vector<1x8x32xf32>,
    %c0_15 = arith.constant 0 : index
    %c0_16 = arith.constant 0 : index
    %c0_17 = arith.constant 0 : index
    %23 = vector.load %arg6[%c0_15, %c0_16, %c0_17] : memref<1x8x8xf32, #tpu.memory_space<vmem>>, vector<1x8x8xf32>
    %24 = vector.shape_cast %23 : vector<1x8x8xf32> to vector<8x8xf32>
    %25 = vector.shape_cast %18 : vector<8x8xf32> to vector<1x8x8xf32>
    tpu.vector_store %arg6[%c0_15, %c0_16, %c0_17], %25 {strides = array<i32>} : memref<1x8x8xf32, #tpu.memory_space<vmem>>, vector<1x8x8xf32>,
    return
  }
  func.func @transform_0(%arg0: i32, %arg1: i32) -> (i32, i32, i32) {
    %c0_i32 = arith.constant 0 : i32
    %c0_i32_0 = arith.constant 0 : i32
    return %arg0, %arg1, %c0_i32 : i32, i32, i32
  }
  func.func @transform_1(%arg0: i32, %arg1: i32) -> (i32, i32, i32) {
    %c0_i32 = arith.constant 0 : i32
    %c0_i32_0 = arith.constant 0 : i32
    %c0_i32_1 = arith.constant 0 : i32
    return %arg0, %c0_i32, %c0_i32_0 : i32, i32, i32
  }
  func.func @transform_2(%arg0: i32, %arg1: i32) -> (i32, i32, i32) {
    %c0_i32 = arith.constant 0 : i32
    %c0_i32_0 = arith.constant 0 : i32
    %c0_i32_1 = arith.constant 0 : i32
    return %arg0, %c0_i32, %c0_i32_0 : i32, i32, i32
  }
  func.func @transform_3(%arg0: i32, %arg1: i32) -> (i32, i32, i32) {
    %c0_i32 = arith.constant 0 : i32
    %c0_i32_0 = arith.constant 0 : i32
    return %arg0, %arg1, %c0_i32 : i32, i32, i32
  }
  func.func @transform_4(%arg0: i32, %arg1: i32) -> (i32, i32, i32) {
    %c0_i32 = arith.constant 0 : i32
    %c0_i32_0 = arith.constant 0 : i32
    return %arg0, %arg1, %c0_i32 : i32, i32, i32
  }
}

</mosaic_0001>

<llo_original>
// kernel: tpu_custom_call.1
$region0: #{tpu_custom_call.1}
  #allocation0 [shape = 'u32[]', space=smem, size = 0x4, offset = 0x4, fixed_abs, tag = 'smem constant byte address 0x4 - core index']
  #allocation1 [shape = 'u32[144,128]{1,0:T(1,128)}', space=vmem, size = 0x12000, scoped, tag = 'internal scratch']
  %s0 = inlined_call_operand.hbm [shape: f32[4,8,32], index: 0, kind: input, shape index: {}]
  %s1 = inlined_call_operand.hbm [shape: f32[4,8,32], index: 1, kind: input, shape index: {}]
  %s2 = inlined_call_operand.hbm [shape: f32[4,8,32], index: 2, kind: input, shape index: {}]
  %s3 = inlined_call_operand.hbm [shape: f32[4,8,32], index: 3, kind: output, shape index: {0}]
  %s4 = inlined_call_operand.hbm [shape: f32[4,8,8], index: 4, kind: output, shape index: {1}]
  %5 = xla_tuple %s3, %s4
  %s6 = sld [smem:[#allocation0]]
  $region65: #{tpu_custom_call.1} parent=0
    _
  %s8 = ssub.s32 1, %s6
  %s9 = scalar_select 0, %s8, %s6
  $region1: #{tpu_custom_call.1} parent=0
    #allocation2 [shape = 'u8[8192]{0}', space=vmem, size = 0x2000, scoped, tag = 'input window, operand 0']
    #allocation3 [shape = 's32[2]{0}', space=sflag, size = 0x8, scoped, tag = 'scoped memory for tpu_custom_call.1']
    #allocation4 [shape = 's32[2]{0}', space=sflag, size = 0x8, scoped, tag = 'scoped memory for tpu_custom_call.1']
    #allocation5 [shape = 'u8[8192]{0}', space=vmem, size = 0x2000, scoped, tag = 'input window, operand 1']
    #allocation6 [shape = 's32[2]{0}', space=sflag, size = 0x8, scoped, tag = 'scoped memory for tpu_custom_call.1']
    #allocation7 [shape = 'u8[8192]{0}', space=vmem, size = 0x2000, scoped, tag = 'input window, operand 2']
    #allocation8 [shape = 'u8[8192]{0}', space=vmem, size = 0x2000, scoped, tag = 'output window, operand 0']
    #allocation9 [shape = 'u8[8192]{0}', space=vmem, size = 0x2000, scoped, tag = 'output window, operand 1']
    #allocation10 [shape = 's32[2]{0}', space=sflag, size = 0x8, scoped, tag = 'scoped memory for tpu_custom_call.1']
    %10 = vsyncpa [#allocation3], 0
    %s11 = scalar_lea.sflag [#allocation3], 1
    %12 = vsyncpa %s11, 0
    %13 = vsyncpa [#allocation6], 0
    %s14 = scalar_lea.sflag [#allocation6], 1
    %15 = vsyncpa %s14, 0
    %16 = vsyncpa [#allocation4], 0
    %s17 = scalar_lea.sflag [#allocation4], 1
    %18 = vsyncpa %s17, 0
    %19 = vsyncpa [#allocation10], 0
    %s20 = scalar_lea.sflag [#allocation10], 1
    %21 = vsyncpa %s20, 0
    loop: start=0, step=1, limit=6
    $region2: #{tpu_custom_call.1} parent=1 // loop_pre_header
      _
    $region3: #{tpu_custom_call.1} parent=1 // loop_header
      %s23 = sphi 0, %s27
      %p24 = scmp.ge.s32.totalorder %s23, 6
      %s30 = sphi 0, %s42
      %s31 = sphi 0, %s38
      %s32 = sphi 0, %s30
      %s33 = sphi 0, %s31
      %s34 = sphi 0, %s32
      %s35 = sphi 0, %s33
      %s47 = sphi 0, %s49
      %s50 = sphi 0, %s47
      %s51 = sphi 0, %s50
      %s67 = sphi 0, %s51
      %s73 = sphi 0, %s75
      %s76 = sphi 0, %s73
      %s77 = sphi 0, %s76
      %s93 = sphi 0, %s77
      %s99 = sphi 0, %s101
      %s102 = sphi 0, %s99
      %s103 = sphi 0, %s102
      %s119 = sphi 0, %s103
      %s127 = sphi 0, %s129
      %s130 = sphi 0, %s127
      %s131 = sphi 0, %s130
      %s147 = sphi 0, %s131
      %s155 = sphi 0, %s157
      %s158 = sphi 0, %s155
      %s159 = sphi 0, %s158
      %s175 = sphi 0, %s159
    $region4: #{tpu_custom_call.1} parent=1 // loop_header_branch
      %26 = sbr.rel (%p24) target = $region8
    $region5: #{tpu_custom_call.1} parent=1 // loop_body
      %s28 = ssub.s32 %s23, 1
      %s29 = ssub.s32 %s23, 2
      %s36 = sadd.s32 1, %s31
      %p37 = scmp.ge.s32.totalorder %s36, 1
      %s38 = scalar_select %p37, 0, %s36
      %s39 = sadd.s32 1, %s30
      %s40 = scalar_select %p37, %s39, %s30
      %p41 = scmp.ge.s32.totalorder %s40, 4
      %s42 = scalar_select %p41, 0, %s40
      %s43 = ssub.s32 %s30, %s42
      %s44 = ssub.s32 %s31, %s38
      %s45 = sor.u32 %s43, %s44
      %p46 = scmp.eq.s32.totalorder %s45, 0
      %s48 = sadd.s32 %s47, 1
      %s49 = scalar_select %p46, %s47, %s48
      %p52 = pneg %p46
      %p53 = scmp.eq.s32.totalorder %s23, 3
      %p54 = por %p52, %p53
      %p55 = scmp.ne.s32.totalorder %s47, %s50
      %p56 = scmp.eq.s32.totalorder %s23, 0
      %p57 = por %p55, %p56
      %p58 = scmp.ne.s32.totalorder %s47, %s50
      %p59 = scmp.eq.s32.totalorder %s28, 3
      %p60 = por %p58, %p59
      %p61 = scmp.ne.s32.totalorder %s50, %s51
      %p62 = scmp.eq.s32.totalorder %s28, 0
      %p63 = por %p61, %p62
      %p64 = scmp.ne.s32.totalorder %s50, %s51
      %p65 = scmp.eq.s32.totalorder %s29, 3
      %p66 = por %p64, %p65
      %p68 = scmp.ne.s32.totalorder %s51, %s67
      %p69 = scmp.eq.s32.totalorder %s29, 0
      %p70 = por %p68, %p69
      %s71 = ssub.s32 %s30, %s42
      %p72 = scmp.eq.s32.totalorder %s71, 0
      %s74 = sadd.s32 %s73, 1
      %s75 = scalar_select %p72, %s73, %s74
      %p78 = pneg %p72
      %p79 = scmp.eq.s32.totalorder %s23, 3
      %p80 = por %p78, %p79
      %p81 = scmp.ne.s32.totalorder %s73, %s76
      %p82 = scmp.eq.s32.totalorder %s23, 0
      %p83 = por %p81, %p82
      %p84 = scmp.ne.s32.totalorder %s73, %s76
      %p85 = scmp.eq.s32.totalorder %s28, 3
      %p86 = por %p84, %p85
      %p87 = scmp.ne.s32.totalorder %s76, %s77
      %p88 = scmp.eq.s32.totalorder %s28, 0
      %p89 = por %p87, %p88
      %p90 = scmp.ne.s32.totalorder %s76, %s77
      %p91 = scmp.eq.s32.totalorder %s29, 3
      %p92 = por %p90, %p91
      %p94 = scmp.ne.s32.totalorder %s77, %s93
      %p95 = scmp.eq.s32.totalorder %s29, 0
      %p96 = por %p94, %p95
      %s97 = ssub.s32 %s30, %s42
      %p98 = scmp.eq.s32.totalorder %s97, 0
      %s100 = sadd.s32 %s99, 1
      %s101 = scalar_select %p98, %s99, %s100
      %p104 = pneg %p98
      %p105 = scmp.eq.s32.totalorder %s23, 3
      %p106 = por %p104, %p105
      %p107 = scmp.ne.s32.totalorder %s99, %s102
      %p108 = scmp.eq.s32.totalorder %s23, 0
      %p109 = por %p107, %p108
      %p110 = scmp.ne.s32.totalorder %s99, %s102
      %p111 = scmp.eq.s32.totalorder %s28, 3
      %p112 = por %p110, %p111
      %p113 = scmp.ne.s32.totalorder %s102, %s103
      %p114 = scmp.eq.s32.totalorder %s28, 0
      %p115 = por %p113, %p114
      %p116 = scmp.ne.s32.totalorder %s102, %s103
      %p117 = scmp.eq.s32.totalorder %s29, 3
      %p118 = por %p116, %p117
      %p120 = scmp.ne.s32.totalorder %s103, %s119
      %p121 = scmp.eq.s32.totalorder %s29, 0
      %p122 = por %p120, %p121
      %s123 = ssub.s32 %s30, %s42
      %s124 = ssub.s32 %s31, %s38
      %s125 = sor.u32 %s123, %s124
      %p126 = scmp.eq.s32.totalorder %s125, 0
      %s128 = sadd.s32 %s127, 1
      %s129 = scalar_select %p126, %s127, %s128
      %p132 = pneg %p126
      %p133 = scmp.eq.s32.totalorder %s23, 3
      %p134 = por %p132, %p133
      %p135 = scmp.ne.s32.totalorder %s127, %s130
      %p136 = scmp.eq.s32.totalorder %s23, 0
      %p137 = por %p135, %p136
      %p138 = scmp.ne.s32.totalorder %s127, %s130
      %p139 = scmp.eq.s32.totalorder %s28, 3
      %p140 = por %p138, %p139
      %p141 = scmp.ne.s32.totalorder %s130, %s131
      %p142 = scmp.eq.s32.totalorder %s28, 0
      %p143 = por %p141, %p142
      %p144 = scmp.ne.s32.totalorder %s130, %s131
      %p145 = scmp.eq.s32.totalorder %s29, 3
      %p146 = por %p144, %p145
      %p148 = scmp.ne.s32.totalorder %s131, %s147
      %p149 = scmp.eq.s32.totalorder %s29, 0
      %p150 = por %p148, %p149
      %s151 = ssub.s32 %s30, %s42
      %s152 = ssub.s32 %s31, %s38
      %s153 = sor.u32 %s151, %s152
      %p154 = scmp.eq.s32.totalorder %s153, 0
      %s156 = sadd.s32 %s155, 1
      %s157 = scalar_select %p154, %s155, %s156
      %p160 = pneg %p154
      %p161 = scmp.eq.s32.totalorder %s23, 3
      %p162 = por %p160, %p161
      %p163 = scmp.ne.s32.totalorder %s155, %s158
      %p164 = scmp.eq.s32.totalorder %s23, 0
      %p165 = por %p163, %p164
      %p166 = scmp.ne.s32.totalorder %s155, %s158
      %p167 = scmp.eq.s32.totalorder %s28, 3
      %p168 = por %p166, %p167
      %p169 = scmp.ne.s32.totalorder %s158, %s159
      %p170 = scmp.eq.s32.totalorder %s28, 0
      %p171 = por %p169, %p170
      %p172 = scmp.ne.s32.totalorder %s158, %s159
      %p173 = scmp.eq.s32.totalorder %s29, 3
      %p174 = por %p172, %p173
      %p176 = scmp.ne.s32.totalorder %s159, %s175
      %p177 = scmp.eq.s32.totalorder %s29, 0
      %p178 = por %p176, %p177
      %p179 = scmp.le.s32.totalorder 1, %s23
      %p180 = scmp.lt.s32.totalorder %s23, 5
      %p181 = pnand %p179, %p180
      %p182 = pneg %p181
      // Predicated region
      $region9: #{tpu_custom_call.1} parent=5 // pred_check
        _
      $region10: #{tpu_custom_call.1} parent=5 // pred_check_branch
        %184 = sbr.rel (%p181) target = $region12
      $region11: #{tpu_custom_call.1} parent=5 // pred_region
        %s185 = ssub.s32 %s23, 1
      $region12: #{tpu_custom_call.1} parent=5 // pred_fallthru
        _
      %p186 = scmp.lt.s32.totalorder %s23, 4
      // Predicated region
      $region13: #{tpu_custom_call.1} parent=5 // pred_check
        %p187 = pneg %p186
      $region14: #{tpu_custom_call.1} parent=5 // pred_check_branch
        %189 = sbr.rel (%p187) target = $region16
      $region15: #{tpu_custom_call.1} parent=5 // pred_region
        // Predicated region
        $region17: #{tpu_custom_call.1} parent=15 // pred_check
          %p190 = pneg %p57
        $region18: #{tpu_custom_call.1} parent=15 // pred_check_branch
          %192 = sbr.rel (%p190) target = $region20
        $region19: #{tpu_custom_call.1} parent=15 // pred_region
          %s193 = sand.u32 %s47, 1
          %s194 = scalar_lea.sflag [#allocation3], %s193
          %s195 = sand.u32 %s47, 1
          %s196 = smul.addr %s195, 8
          %s197 = scalar_lea.vmem [#allocation2], %s196
          %s199 = ssub.s32 128, 128
          %200 = vsyncadd %s194, %s199
          %s201 = sadd.s32 %s31, %s30
          %s202 = smul.addr %s201, 128
          %s203 = scalar_lea.hbm %s0, %s202
          %s205 = sshll.u32 %s197, 4
          %s206 = int_to_ptr.vmem [resolvable:$true] %s205
          %208 = dma.hbm_to_vmem [thread:$0]  %s203, 128, %s206, %s194
        $region20: #{tpu_custom_call.1} parent=15 // pred_fallthru
          _
        // Predicated region
        $region21: #{tpu_custom_call.1} parent=15 // pred_check
          %p209 = pneg %p83
        $region22: #{tpu_custom_call.1} parent=15 // pred_check_branch
          %211 = sbr.rel (%p209) target = $region24
        $region23: #{tpu_custom_call.1} parent=15 // pred_region
          %s212 = sand.u32 %s23, 1
          %s213 = scalar_lea.sflag [#allocation6], %s212
          %s214 = sand.u32 %s73, 1
          %s215 = smul.addr %s214, 8
          %s216 = scalar_lea.vmem [#allocation5], %s215
          %s218 = ssub.s32 128, 128
          %219 = vsyncadd %s213, %s218
          %s220 = smul.addr %s30, 128
          %s221 = scalar_lea.hbm %s1, %s220
          %s223 = sshll.u32 %s216, 4
          %s224 = int_to_ptr.vmem [resolvable:$true] %s223
          %226 = dma.hbm_to_vmem [thread:$0]  %s221, 128, %s224, %s213
        $region24: #{tpu_custom_call.1} parent=15 // pred_fallthru
          _
        // Predicated region
        $region25: #{tpu_custom_call.1} parent=15 // pred_check
          %p227 = pneg %p109
        $region26: #{tpu_custom_call.1} parent=15 // pred_check_branch
          %229 = sbr.rel (%p227) target = $region28
        $region27: #{tpu_custom_call.1} parent=15 // pred_region
          %s230 = sand.u32 %s23, 1
          %s231 = scalar_lea.sflag [#allocation6], %s230
          %s232 = sand.u32 %s99, 1
          %s233 = smul.addr %s232, 8
          %s234 = scalar_lea.vmem [#allocation7], %s233
          %s236 = ssub.s32 128, 128
          %237 = vsyncadd %s231, %s236
          %s238 = smul.addr %s30, 128
          %s239 = scalar_lea.hbm %s2, %s238
          %s241 = sshll.u32 %s234, 4
          %s242 = int_to_ptr.vmem [resolvable:$true] %s241
          %244 = dma.hbm_to_vmem [thread:$0]  %s239, 128, %s242, %s231
        $region28: #{tpu_custom_call.1} parent=15 // pred_fallthru
          _
      $region16: #{tpu_custom_call.1} parent=5 // pred_fallthru
        _
      %p245 = scmp.le.s32.totalorder 1, %s23
      %p246 = scmp.lt.s32.totalorder %s23, 5
      %p247 = pnand %p245, %p246
      %p248 = pneg %p247
      // Predicated region
      $region29: #{tpu_custom_call.1} parent=5 // pred_check
        _
      $region30: #{tpu_custom_call.1} parent=5 // pred_check_branch
        %250 = sbr.rel (%p247) target = $region32
      $region31: #{tpu_custom_call.1} parent=5 // pred_region
        %s251 = ssub.s32 %s23, 1
        %s252 = sand.u32 %s50, 1
        %s253 = scalar_lea.sflag [#allocation3], %s252
        %s254 = sand.u32 %s50, 1
        %s255 = smul.addr %s254, 8
        %s256 = scalar_lea.vmem [#allocation2], %s255
        // Predicated region
        $region33: #{tpu_custom_call.1} parent=31 // pred_check
          %p257 = pneg %p63
        $region34: #{tpu_custom_call.1} parent=31 // pred_check_branch
          %259 = sbr.rel (%p257) target = $region36
        $region35: #{tpu_custom_call.1} parent=31 // pred_region
          %260 = dma.done %s253, 128
        $region36: #{tpu_custom_call.1} parent=31 // pred_fallthru
          _
        %s261 = sand.u32 %s28, 1
        %s262 = scalar_lea.sflag [#allocation6], %s261
        %s263 = sand.u32 %s76, 1
        %s264 = smul.addr %s263, 8
        %s265 = scalar_lea.vmem [#allocation5], %s264
        // Predicated region
        $region37: #{tpu_custom_call.1} parent=31 // pred_check
          %p266 = pneg %p89
        $region38: #{tpu_custom_call.1} parent=31 // pred_check_branch
          %268 = sbr.rel (%p266) target = $region40
        $region39: #{tpu_custom_call.1} parent=31 // pred_region
          %269 = dma.done %s262, 128
        $region40: #{tpu_custom_call.1} parent=31 // pred_fallthru
          _
        %s270 = sand.u32 %s28, 1
        %s271 = scalar_lea.sflag [#allocation6], %s270
        %s272 = sand.u32 %s102, 1
        %s273 = smul.addr %s272, 8
        %s274 = scalar_lea.vmem [#allocation7], %s273
        // Predicated region
        $region41: #{tpu_custom_call.1} parent=31 // pred_check
          %p275 = pneg %p115
        $region42: #{tpu_custom_call.1} parent=31 // pred_check_branch
          %277 = sbr.rel (%p275) target = $region44
        $region43: #{tpu_custom_call.1} parent=31 // pred_region
          %278 = dma.done %s271, 128
        $region44: #{tpu_custom_call.1} parent=31 // pred_fallthru
          _
        %s279 = sand.u32 %s50, 1
        %s280 = scalar_lea.sflag [#allocation3], %s279
        %s281 = sand.u32 %s50, 1
        %s282 = smul.addr %s281, 8
        %s283 = scalar_lea.vmem [#allocation2], %s282
        %p284 = pneg %p63
        %p285 = pneg %p60
        %s286 = sand.u32 %s28, 1
        %s287 = scalar_lea.sflag [#allocation6], %s286
        %s288 = sand.u32 %s76, 1
        %s289 = smul.addr %s288, 8
        %s290 = scalar_lea.vmem [#allocation5], %s289
        %p291 = pneg %p89
        %p292 = pneg %p86
        %s293 = sand.u32 %s28, 1
        %s294 = scalar_lea.sflag [#allocation6], %s293
        %s295 = sand.u32 %s102, 1
        %s296 = smul.addr %s295, 8
        %s297 = scalar_lea.vmem [#allocation7], %s296
        %p298 = pneg %p115
        %p299 = pneg %p112
        %p300 = pneg %p143
        %p301 = pneg %p140
        %s302 = sand.u32 %s130, 1
        %s303 = scalar_lea.sflag [#allocation4], %s302
        %s304 = sand.u32 %s130, 1
        %s305 = smul.addr %s304, 8
        %s306 = scalar_lea.vmem [#allocation8], %s305
        %p307 = pneg %p171
        %p308 = pneg %p168
        %s309 = sand.u32 %s158, 1
        %s310 = scalar_lea.sflag [#allocation10], %s309
        %s311 = sand.u32 %s158, 1
        %s312 = smul.addr %s311, 8
        %s313 = scalar_lea.vmem [#allocation9], %s312
        %v314 = vld [vmem:[%s256] sm:$0xff]
        %v315 = vmul.f32 %v314, 0.17677669
        %v316 = vld [vmem:[%s265] sm:$0xff]
        %v317 = vld [vmem:[%s274] sm:$0xff]
        %vm318 = vcmask 261120
        %v320 = vsel %vm318, %v315, 0
        %v323 = vsel %vm318, %v316, 0
        %325 = vmatprep.subr.mxu0 0.0
        %v326 = vand.u32 %v323, 4294901760
        %327 = vmatpush1.xpose.msra.mxu0 %v326
        %328 = vmatprep.subr.mxu0 0.0
        %329 = vmatpush1.xpose.msra.mxu0 0.0
        %330 = vmatprep.subr.mxu0 0.0
        %331 = vmatpush1.xpose.msra.mxu0 0.0
        %332 = vmatprep.subr.mxu0 0.0
        %333 = vmatpush1.xpose.msra.mxu0 0.0
        %334 = vmatprep.subr.mxu0 0.0
        %335 = vmatpush1.xpose.msra.mxu0 0.0
        %336 = vmatprep.subr.mxu0 0.0
        %337 = vmatpush1.xpose.msra.mxu0 0.0
        %338 = vmatprep.subr.mxu0 0.0
        %339 = vmatpush1.xpose.msra.mxu0 0.0
        %340 = vmatprep.subr.mxu0 0.0
        %341 = vmatpush1.xpose.msra.mxu0 0.0
        %342 = vmatprep.subr.mxu0 0.0
        %343 = vmatpush1.xpose.msra.mxu0 0.0
        %344 = vmatprep.subr.mxu0 0.0
        %345 = vmatpush1.xpose.msra.mxu0 0.0
        %346 = vmatprep.subr.mxu0 0.0
        %347 = vmatpush1.xpose.msra.mxu0 0.0
        %348 = vmatprep.subr.mxu0 0.0
        %349 = vmatpush1.xpose.msra.mxu0 0.0
        %350 = vmatprep.subr.mxu0 0.0
        %351 = vmatpush1.xpose.msra.mxu0 0.0
        %352 = vmatprep.subr.mxu0 0.0
        %353 = vmatpush1.xpose.msra.mxu0 0.0
        %354 = vmatprep.subr.mxu0 0.0
        %355 = vmatpush1.xpose.msra.mxu0 0.0
        %356 = vmatprep.subr.mxu0 0.0
        %357 = vmatpush1.xpose.msra.mxu0 0.0
        %358 = vmatprep.subr.mxu0 0.0
        %359 = vmatpush1.xpose.msra.mxu0 0.0
        %360 = vmatprep.subr.mxu0 0.0
        %361 = vmatpush1.xpose.msra.mxu0 0.0
        %362 = vmatprep.subr.mxu0 0.0
        %363 = vmatpush1.xpose.msra.mxu0 0.0
        %364 = vmatprep.subr.mxu0 0.0
        %365 = vmatpush1.xpose.msra.mxu0 0.0
        %366 = vmatprep.subr.mxu0 0.0
        %367 = vmatpush1.xpose.msra.mxu0 0.0
        %368 = vmatprep.subr.mxu0 0.0
        %369 = vmatpush1.xpose.msra.mxu0 0.0
        %370 = vmatprep.subr.mxu0 0.0
        %371 = vmatpush1.xpose.msra.mxu0 0.0
        %372 = vmatprep.subr.mxu0 0.0
        %373 = vmatpush1.xpose.msra.mxu0 0.0
        %374 = vmatprep.subr.mxu0 0.0
        %375 = vmatpush1.xpose.msra.mxu0 0.0
        %376 = vmatprep.subr.mxu0 0.0
        %377 = vmatpush1.xpose.msra.mxu0 0.0
        %378 = vmatprep.subr.mxu0 0.0
        %379 = vmatpush1.xpose.msra.mxu0 0.0
        %380 = vmatprep.subr.mxu0 0.0
        %381 = vmatpush1.xpose.msra.mxu0 0.0
        %382 = vmatprep.subr.mxu0 0.0
        %383 = vmatpush1.xpose.msra.mxu0 0.0
        %384 = vmatprep.subr.mxu0 0.0
        %385 = vmatpush1.xpose.msra.mxu0 0.0
        %386 = vmatprep.subr.mxu0 0.0
        %387 = vmatpush1.xpose.msra.mxu0 0.0
        %388 = vmatprep.subr.mxu0 0.0
        %389 = vmatpush1.xpose.msra.mxu0 0.0
        %390 = vmatprep.mubr.f32.mxu0 0.0
        %v391 = vand.u32 %v320, 4294901760
        %v392 = vsub.f32 %v320, %v391
        %v393 = vand.u32 %v392, 4294901760
        %v394 = vsub.f32 %v392, %v393
        %v395 = vand.u32 %v394, 4294901760
        %396 = vmatmul.mubr.f32.gmra.mrb[0].mxu0 %v395
        %v397 = vpop.f32.mrb[0].mxu0
        %v398 = vadd.f32 0.0, %v397
        %v399 = vpop.f32.mrb[0].mxu0
        %400 = vdwg.mxu0
        %401 = vmatprep.subr.mxu0 0.0
        %v402 = vand.u32 %v323, 4294901760
        %v403 = vsub.f32 %v323, %v402
        %v404 = vand.u32 %v403, 4294901760
        %v405 = vsub.f32 %v403, %v404
        %v406 = vand.u32 %v405, 4294901760
        %407 = vmatpush1.xpose.msra.mxu0 %v406
        %408 = vmatprep.subr.mxu0 0.0
        %409 = vmatpush1.xpose.msra.mxu0 0.0
        %410 = vmatprep.subr.mxu0 0.0
        %411 = vmatpush1.xpose.msra.mxu0 0.0
        %412 = vmatprep.subr.mxu0 0.0
        %413 = vmatpush1.xpose.msra.mxu0 0.0
        %414 = vmatprep.subr.mxu0 0.0
        %415 = vmatpush1.xpose.msra.mxu0 0.0
        %416 = vmatprep.subr.mxu0 0.0
        %417 = vmatpush1.xpose.msra.mxu0 0.0
        %418 = vmatprep.subr.mxu0 0.0
        %419 = vmatpush1.xpose.msra.mxu0 0.0
        %420 = vmatprep.subr.mxu0 0.0
        %421 = vmatpush1.xpose.msra.mxu0 0.0
        %422 = vmatprep.subr.mxu0 0.0
        %423 = vmatpush1.xpose.msra.mxu0 0.0
        %424 = vmatprep.subr.mxu0 0.0
        %425 = vmatpush1.xpose.msra.mxu0 0.0
        %426 = vmatprep.subr.mxu0 0.0
        %427 = vmatpush1.xpose.msra.mxu0 0.0
        %428 = vmatprep.subr.mxu0 0.0
        %429 = vmatpush1.xpose.msra.mxu0 0.0
        %430 = vmatprep.subr.mxu0 0.0
        %431 = vmatpush1.xpose.msra.mxu0 0.0
        %432 = vmatprep.subr.mxu0 0.0
        %433 = vmatpush1.xpose.msra.mxu0 0.0
        %434 = vmatprep.subr.mxu0 0.0
        %435 = vmatpush1.xpose.msra.mxu0 0.0
        %436 = vmatprep.subr.mxu0 0.0
        %437 = vmatpush1.xpose.msra.mxu0 0.0
        %438 = vmatprep.subr.mxu0 0.0
        %439 = vmatpush1.xpose.msra.mxu0 0.0
        %440 = vmatprep.subr.mxu0 0.0
        %441 = vmatpush1.xpose.msra.mxu0 0.0
        %442 = vmatprep.subr.mxu0 0.0
        %443 = vmatpush1.xpose.msra.mxu0 0.0
        %444 = vmatprep.subr.mxu0 0.0
        %445 = vmatpush1.xpose.msra.mxu0 0.0
        %446 = vmatprep.subr.mxu0 0.0
        %447 = vmatpush1.xpose.msra.mxu0 0.0
        %448 = vmatprep.subr.mxu0 0.0
        %449 = vmatpush1.xpose.msra.mxu0 0.0
        %450 = vmatprep.subr.mxu0 0.0
        %451 = vmatpush1.xpose.msra.mxu0 0.0
        %452 = vmatprep.subr.mxu0 0.0
        %453 = vmatpush1.xpose.msra.mxu0 0.0
        %454 = vmatprep.subr.mxu0 0.0
        %455 = vmatpush1.xpose.msra.mxu0 0.0
        %456 = vmatprep.subr.mxu0 0.0
        %457 = vmatpush1.xpose.msra.mxu0 0.0
        %458 = vmatprep.subr.mxu0 0.0
        %459 = vmatpush1.xpose.msra.mxu0 0.0
        %460 = vmatprep.subr.mxu0 0.0
        %461 = vmatpush1.xpose.msra.mxu0 0.0
        %462 = vmatprep.subr.mxu0 0.0
        %463 = vmatpush1.xpose.msra.mxu0 0.0
        %464 = vmatprep.subr.mxu0 0.0
        %465 = vmatpush1.xpose.msra.mxu0 0.0
        %466 = vmatprep.subr.mxu0 0.0
        %467 = vmatpush1.xpose.msra.mxu0 0.0
        %468 = vmatprep.subr.mxu0 0.0
        %469 = vmatpush1.xpose.msra.mxu0 0.0
        %470 = vmatprep.mubr.f32.mxu0 0.0
        %v471 = vand.u32 %v320, 4294901760
        %472 = vmatmul.mubr.f32.gmra.mrb[0].mxu0 %v471
        %v473 = vpop.f32.mrb[0].mxu0
        %v474 = vadd.f32 %v398, %v473
        %v475 = vpop.f32.mrb[0].mxu0
        %476 = vdwg.mxu0
        %477 = vmatprep.subr.mxu0 0.0
        %v478 = vand.u32 %v323, 4294901760
        %v479 = vsub.f32 %v323, %v478
        %480 = vmatpush1.xpose.msra.mxu0 %v479
        %481 = vmatprep.subr.mxu0 0.0
        %482 = vmatpush1.xpose.msra.mxu0 0.0
        %483 = vmatprep.subr.mxu0 0.0
        %484 = vmatpush1.xpose.msra.mxu0 0.0
        %485 = vmatprep.subr.mxu0 0.0
        %486 = vmatpush1.xpose.msra.mxu0 0.0
        %487 = vmatprep.subr.mxu0 0.0
        %488 = vmatpush1.xpose.msra.mxu0 0.0
        %489 = vmatprep.subr.mxu0 0.0
        %490 = vmatpush1.xpose.msra.mxu0 0.0
        %491 = vmatprep.subr.mxu0 0.0
        %492 = vmatpush1.xpose.msra.mxu0 0.0
        %493 = vmatprep.subr.mxu0 0.0
        %494 = vmatpush1.xpose.msra.mxu0 0.0
        %495 = vmatprep.subr.mxu0 0.0
        %496 = vmatpush1.xpose.msra.mxu0 0.0
        %497 = vmatprep.subr.mxu0 0.0
        %498 = vmatpush1.xpose.msra.mxu0 0.0
        %499 = vmatprep.subr.mxu0 0.0
        %500 = vmatpush1.xpose.msra.mxu0 0.0
        %501 = vmatprep.subr.mxu0 0.0
        %502 = vmatpush1.xpose.msra.mxu0 0.0
        %503 = vmatprep.subr.mxu0 0.0
        %504 = vmatpush1.xpose.msra.mxu0 0.0
        %505 = vmatprep.subr.mxu0 0.0
        %506 = vmatpush1.xpose.msra.mxu0 0.0
        %507 = vmatprep.subr.mxu0 0.0
        %508 = vmatpush1.xpose.msra.mxu0 0.0
        %509 = vmatprep.subr.mxu0 0.0
        %510 = vmatpush1.xpose.msra.mxu0 0.0
        %511 = vmatprep.subr.mxu0 0.0
        %512 = vmatpush1.xpose.msra.mxu0 0.0
        %513 = vmatprep.subr.mxu0 0.0
        %514 = vmatpush1.xpose.msra.mxu0 0.0
        %515 = vmatprep.subr.mxu0 0.0
        %516 = vmatpush1.xpose.msra.mxu0 0.0
        %517 = vmatprep.subr.mxu0 0.0
        %518 = vmatpush1.xpose.msra.mxu0 0.0
        %519 = vmatprep.subr.mxu0 0.0
        %520 = vmatpush1.xpose.msra.mxu0 0.0
        %521 = vmatprep.subr.mxu0 0.0
        %522 = vmatpush1.xpose.msra.mxu0 0.0
        %523 = vmatprep.subr.mxu0 0.0
        %524 = vmatpush1.xpose.msra.mxu0 0.0
        %525 = vmatprep.subr.mxu0 0.0
        %526 = vmatpush1.xpose.msra.mxu0 0.0
        %527 = vmatprep.subr.mxu0 0.0
        %528 = vmatpush1.xpose.msra.mxu0 0.0
        %529 = vmatprep.subr.mxu0 0.0
        %530 = vmatpush1.xpose.msra.mxu0 0.0
        %531 = vmatprep.subr.mxu0 0.0
        %532 = vmatpush1.xpose.msra.mxu0 0.0
        %533 = vmatprep.subr.mxu0 0.0
        %534 = vmatpush1.xpose.msra.mxu0 0.0
        %535 = vmatprep.subr.mxu0 0.0
        %536 = vmatpush1.xpose.msra.mxu0 0.0
        %537 = vmatprep.subr.mxu0 0.0
        %538 = vmatpush1.xpose.msra.mxu0 0.0
        %539 = vmatprep.subr.mxu0 0.0
        %540 = vmatpush1.xpose.msra.mxu0 0.0
        %541 = vmatprep.subr.mxu0 0.0
        %542 = vmatpush1.xpose.msra.mxu0 0.0
        %543 = vmatprep.mubr.f32.mxu0 0.0
        %v544 = vand.u32 %v320, 4294901760
        %v545 = vsub.f32 %v320, %v544
        %546 = vmatmul.mubr.f32.gmra.mrb[0].mxu0 %v545
        %v547 = vpop.f32.mrb[0].mxu0
        %v548 = vadd.f32 %v474, %v547
        %v549 = vpop.f32.mrb[0].mxu0
        %550 = vdwg.mxu0
        %551 = vmatprep.subr.mxu0 0.0
        %v552 = vand.u32 %v323, 4294901760
        %553 = vmatpush1.xpose.msra.mxu0 %v552
        %554 = vmatprep.subr.mxu0 0.0
        %555 = vmatpush1.xpose.msra.mxu0 0.0
        %556 = vmatprep.subr.mxu0 0.0
        %557 = vmatpush1.xpose.msra.mxu0 0.0
        %558 = vmatprep.subr.mxu0 0.0
        %559 = vmatpush1.xpose.msra.mxu0 0.0
        %560 = vmatprep.subr.mxu0 0.0
        %561 = vmatpush1.xpose.msra.mxu0 0.0
        %562 = vmatprep.subr.mxu0 0.0
        %563 = vmatpush1.xpose.msra.mxu0 0.0
        %564 = vmatprep.subr.mxu0 0.0
        %565 = vmatpush1.xpose.msra.mxu0 0.0
        %566 = vmatprep.subr.mxu0 0.0
        %567 = vmatpush1.xpose.msra.mxu0 0.0
        %568 = vmatprep.subr.mxu0 0.0
        %569 = vmatpush1.xpose.msra.mxu0 0.0
        %570 = vmatprep.subr.mxu0 0.0
        %571 = vmatpush1.xpose.msra.mxu0 0.0
        %572 = vmatprep.subr.mxu0 0.0
        %573 = vmatpush1.xpose.msra.mxu0 0.0
        %574 = vmatprep.subr.mxu0 0.0
        %575 = vmatpush1.xpose.msra.mxu0 0.0
        %576 = vmatprep.subr.mxu0 0.0
        %577 = vmatpush1.xpose.msra.mxu0 0.0
        %578 = vmatprep.subr.mxu0 0.0
        %579 = vmatpush1.xpose.msra.mxu0 0.0
        %580 = vmatprep.subr.mxu0 0.0
        %581 = vmatpush1.xpose.msra.mxu0 0.0
        %582 = vmatprep.subr.mxu0 0.0
        %583 = vmatpush1.xpose.msra.mxu0 0.0
        %584 = vmatprep.subr.mxu0 0.0
        %585 = vmatpush1.xpose.msra.mxu0 0.0
        %586 = vmatprep.subr.mxu0 0.0
        %587 = vmatpush1.xpose.msra.mxu0 0.0
        %588 = vmatprep.subr.mxu0 0.0
        %589 = vmatpush1.xpose.msra.mxu0 0.0
        %590 = vmatprep.subr.mxu0 0.0
        %591 = vmatpush1.xpose.msra.mxu0 0.0
        %592 = vmatprep.subr.mxu0 0.0
        %593 = vmatpush1.xpose.msra.mxu0 0.0
        %594 = vmatprep.subr.mxu0 0.0
        %595 = vmatpush1.xpose.msra.mxu0 0.0
        %596 = vmatprep.subr.mxu0 0.0
        %597 = vmatpush1.xpose.msra.mxu0 0.0
        %598 = vmatprep.subr.mxu0 0.0
        %599 = vmatpush1.xpose.msra.mxu0 0.0
        %600 = vmatprep.subr.mxu0 0.0
        %601 = vmatpush1.xpose.msra.mxu0 0.0
        %602 = vmatprep.subr.mxu0 0.0
        %603 = vmatpush1.xpose.msra.mxu0 0.0
        %604 = vmatprep.subr.mxu0 0.0
        %605 = vmatpush1.xpose.msra.mxu0 0.0
        %606 = vmatprep.subr.mxu0 0.0
        %607 = vmatpush1.xpose.msra.mxu0 0.0
        %608 = vmatprep.subr.mxu0 0.0
        %609 = vmatpush1.xpose.msra.mxu0 0.0
        %610 = vmatprep.subr.mxu0 0.0
        %611 = vmatpush1.xpose.msra.mxu0 0.0
        %612 = vmatprep.subr.mxu0 0.0
        %613 = vmatpush1.xpose.msra.mxu0 0.0
        %614 = vmatprep.subr.mxu0 0.0
        %615 = vmatpush1.xpose.msra.mxu0 0.0
        %616 = vmatprep.mubr.f32.mxu0 0.0
        %v617 = vand.u32 %v320, 4294901760
        %v618 = vsub.f32 %v320, %v617
        %v619 = vand.u32 %v618, 4294901760
        %620 = vmatmul.mubr.f32.gmra.mrb[0].mxu0 %v619
        %v621 = vpop.f32.mrb[0].mxu0
        %v622 = vadd.f32 %v548, %v621
        %v623 = vpop.f32.mrb[0].mxu0
        %624 = vdwg.mxu0
        %625 = vmatprep.subr.mxu0 0.0
        %v626 = vand.u32 %v323, 4294901760
        %v627 = vsub.f32 %v323, %v626
        %v628 = vand.u32 %v627, 4294901760
        %629 = vmatpush1.xpose.msra.mxu0 %v628
        %630 = vmatprep.subr.mxu0 0.0
        %631 = vmatpush1.xpose.msra.mxu0 0.0
        %632 = vmatprep.subr.mxu0 0.0
        %633 = vmatpush1.xpose.msra.mxu0 0.0
        %634 = vmatprep.subr.mxu0 0.0
        %635 = vmatpush1.xpose.msra.mxu0 0.0
        %636 = vmatprep.subr.mxu0 0.0
        %637 = vmatpush1.xpose.msra.mxu0 0.0
        %638 = vmatprep.subr.mxu0 0.0
        %639 = vmatpush1.xpose.msra.mxu0 0.0
        %640 = vmatprep.subr.mxu0 0.0
        %641 = vmatpush1.xpose.msra.mxu0 0.0
        %642 = vmatprep.subr.mxu0 0.0
        %643 = vmatpush1.xpose.msra.mxu0 0.0
        %644 = vmatprep.subr.mxu0 0.0
        %645 = vmatpush1.xpose.msra.mxu0 0.0
        %646 = vmatprep.subr.mxu0 0.0
        %647 = vmatpush1.xpose.msra.mxu0 0.0
        %648 = vmatprep.subr.mxu0 0.0
        %649 = vmatpush1.xpose.msra.mxu0 0.0
        %650 = vmatprep.subr.mxu0 0.0
        %651 = vmatpush1.xpose.msra.mxu0 0.0
        %652 = vmatprep.subr.mxu0 0.0
        %653 = vmatpush1.xpose.msra.mxu0 0.0
        %654 = vmatprep.subr.mxu0 0.0
        %655 = vmatpush1.xpose.msra.mxu0 0.0
        %656 = vmatprep.subr.mxu0 0.0
        %657 = vmatpush1.xpose.msra.mxu0 0.0
        %658 = vmatprep.subr.mxu0 0.0
        %659 = vmatpush1.xpose.msra.mxu0 0.0
        %660 = vmatprep.subr.mxu0 0.0
        %661 = vmatpush1.xpose.msra.mxu0 0.0
        %662 = vmatprep.subr.mxu0 0.0
        %663 = vmatpush1.xpose.msra.mxu0 0.0
        %664 = vmatprep.subr.mxu0 0.0
        %665 = vmatpush1.xpose.msra.mxu0 0.0
        %666 = vmatprep.subr.mxu0 0.0
        %667 = vmatpush1.xpose.msra.mxu0 0.0
        %668 = vmatprep.subr.mxu0 0.0
        %669 = vmatpush1.xpose.msra.mxu0 0.0
        %670 = vmatprep.subr.mxu0 0.0
        %671 = vmatpush1.xpose.msra.mxu0 0.0
        %672 = vmatprep.subr.mxu0 0.0
        %673 = vmatpush1.xpose.msra.mxu0 0.0
        %674 = vmatprep.subr.mxu0 0.0
        %675 = vmatpush1.xpose.msra.mxu0 0.0
        %676 = vmatprep.subr.mxu0 0.0
        %677 = vmatpush1.xpose.msra.mxu0 0.0
        %678 = vmatprep.subr.mxu0 0.0
        %679 = vmatpush1.xpose.msra.mxu0 0.0
        %680 = vmatprep.subr.mxu0 0.0
        %681 = vmatpush1.xpose.msra.mxu0 0.0
        %682 = vmatprep.subr.mxu0 0.0
        %683 = vmatpush1.xpose.msra.mxu0 0.0
        %684 = vmatprep.subr.mxu0 0.0
        %685 = vmatpush1.xpose.msra.mxu0 0.0
        %686 = vmatprep.subr.mxu0 0.0
        %687 = vmatpush1.xpose.msra.mxu0 0.0
        %688 = vmatprep.subr.mxu0 0.0
        %689 = vmatpush1.xpose.msra.mxu0 0.0
        %690 = vmatprep.subr.mxu0 0.0
        %691 = vmatpush1.xpose.msra.mxu0 0.0
        %692 = vmatprep.mubr.f32.mxu0 0.0
        %v693 = vand.u32 %v320, 4294901760
        %694 = vmatmul.mubr.f32.gmra.mrb[0].mxu0 %v693
        %v695 = vpop.f32.mrb[0].mxu0
        %v696 = vadd.f32 %v622, %v695
        %v697 = vpop.f32.mrb[0].mxu0
        %698 = vdwg.mxu0
        %699 = vmatprep.subr.mxu0 0.0
        %v700 = vand.u32 %v323, 4294901760
        %701 = vmatpush1.xpose.msra.mxu0 %v700
        %702 = vmatprep.subr.mxu0 0.0
        %703 = vmatpush1.xpose.msra.mxu0 0.0
        %704 = vmatprep.subr.mxu0 0.0
        %705 = vmatpush1.xpose.msra.mxu0 0.0
        %706 = vmatprep.subr.mxu0 0.0
        %707 = vmatpush1.xpose.msra.mxu0 0.0
        %708 = vmatprep.subr.mxu0 0.0
        %709 = vmatpush1.xpose.msra.mxu0 0.0
        %710 = vmatprep.subr.mxu0 0.0
        %711 = vmatpush1.xpose.msra.mxu0 0.0
        %712 = vmatprep.subr.mxu0 0.0
        %713 = vmatpush1.xpose.msra.mxu0 0.0
        %714 = vmatprep.subr.mxu0 0.0
        %715 = vmatpush1.xpose.msra.mxu0 0.0
        %716 = vmatprep.subr.mxu0 0.0
        %717 = vmatpush1.xpose.msra.mxu0 0.0
        %718 = vmatprep.subr.mxu0 0.0
        %719 = vmatpush1.xpose.msra.mxu0 0.0
        %720 = vmatprep.subr.mxu0 0.0
        %721 = vmatpush1.xpose.msra.mxu0 0.0
        %722 = vmatprep.subr.mxu0 0.0
        %723 = vmatpush1.xpose.msra.mxu0 0.0
        %724 = vmatprep.subr.mxu0 0.0
        %725 = vmatpush1.xpose.msra.mxu0 0.0
        %726 = vmatprep.subr.mxu0 0.0
        %727 = vmatpush1.xpose.msra.mxu0 0.0
        %728 = vmatprep.subr.mxu0 0.0
        %729 = vmatpush1.xpose.msra.mxu0 0.0
        %730 = vmatprep.subr.mxu0 0.0
        %731 = vmatpush1.xpose.msra.mxu0 0.0
        %732 = vmatprep.subr.mxu0 0.0
        %733 = vmatpush1.xpose.msra.mxu0 0.0
        %734 = vmatprep.subr.mxu0 0.0
        %735 = vmatpush1.xpose.msra.mxu0 0.0
        %736 = vmatprep.subr.mxu0 0.0
        %737 = vmatpush1.xpose.msra.mxu0 0.0
        %738 = vmatprep.subr.mxu0 0.0
        %739 = vmatpush1.xpose.msra.mxu0 0.0
        %740 = vmatprep.subr.mxu0 0.0
        %741 = vmatpush1.xpose.msra.mxu0 0.0
        %742 = vmatprep.subr.mxu0 0.0
        %743 = vmatpush1.xpose.msra.mxu0 0.0
        %744 = vmatprep.subr.mxu0 0.0
        %745 = vmatpush1.xpose.msra.mxu0 0.0
        %746 = vmatprep.subr.mxu0 0.0
        %747 = vmatpush1.xpose.msra.mxu0 0.0
        %748 = vmatprep.subr.mxu0 0.0
        %749 = vmatpush1.xpose.msra.mxu0 0.0
        %750 = vmatprep.subr.mxu0 0.0
        %751 = vmatpush1.xpose.msra.mxu0 0.0
        %752 = vmatprep.subr.mxu0 0.0
        %753 = vmatpush1.xpose.msra.mxu0 0.0
        %754 = vmatprep.subr.mxu0 0.0
        %755 = vmatpush1.xpose.msra.mxu0 0.0
        %756 = vmatprep.subr.mxu0 0.0
        %757 = vmatpush1.xpose.msra.mxu0 0.0
        %758 = vmatprep.subr.mxu0 0.0
        %759 = vmatpush1.xpose.msra.mxu0 0.0
        %760 = vmatprep.subr.mxu0 0.0
        %761 = vmatpush1.xpose.msra.mxu0 0.0
        %762 = vmatprep.subr.mxu0 0.0
        %763 = vmatpush1.xpose.msra.mxu0 0.0
        %764 = vmatprep.mubr.f32.mxu0 0.0
        %v765 = vand.u32 %v320, 4294901760
        %766 = vmatmul.mubr.f32.gmra.mrb[0].mxu0 %v765
        %v767 = vpop.f32.mrb[0].mxu0
        %v768 = vadd.f32 %v696, %v767
        %v769 = vpop.f32.mrb[0].mxu0
        %770 = vdwg.mxu0
        %vm771 = vcmask 64512
        %v772 = vsel %vm771, %v768, -inf
        %773 = vmax.xlane.f32.xlu0 %v772
        %v774 = vpop.xlane.xlu0 %773
        %v775 = vsub.f32 %v768, %v774
        %v776 = vmul.f32 %v775, 1.442695
        %v777 = vpow.pop %v776
        %v778 = vsel %vm771, %v777, 0.0
        %779 = vadd.xlane.f32.xlu0 %v778
        %v780 = vpop.xlane.xlu0 %779
        %v781 = vrcp.pop %v780
        %v782 = vmul.f32 %v777, %v781
        %v784 = vsel %vm771, %v782, 0
        %786 = vmatprep.subr.mxu0 0.0
        %v787 = vand.u32 %v317, 4294901760
        %788 = vmatpush1.msra.mxu0 %v787
        %789 = vmatprep.subr.mxu0 0.0
        %790 = vmatpush1.msra.mxu0 0.0
        %791 = vmatprep.subr.mxu0 0.0
        %792 = vmatpush1.msra.mxu0 0.0
        %793 = vmatprep.subr.mxu0 0.0
        %794 = vmatpush1.msra.mxu0 0.0
        %795 = vmatprep.subr.mxu0 0.0
        %796 = vmatpush1.msra.mxu0 0.0
        %797 = vmatprep.subr.mxu0 0.0
        %798 = vmatpush1.msra.mxu0 0.0
        %799 = vmatprep.subr.mxu0 0.0
        %800 = vmatpush1.msra.mxu0 0.0
        %801 = vmatprep.subr.mxu0 0.0
        %802 = vmatpush1.msra.mxu0 0.0
        %803 = vmatprep.subr.mxu0 0.0
        %804 = vmatpush1.msra.mxu0 0.0
        %805 = vmatprep.subr.mxu0 0.0
        %806 = vmatpush1.msra.mxu0 0.0
        %807 = vmatprep.subr.mxu0 0.0
        %808 = vmatpush1.msra.mxu0 0.0
        %809 = vmatprep.subr.mxu0 0.0
        %810 = vmatpush1.msra.mxu0 0.0
        %811 = vmatprep.subr.mxu0 0.0
        %812 = vmatpush1.msra.mxu0 0.0
        %813 = vmatprep.subr.mxu0 0.0
        %814 = vmatpush1.msra.mxu0 0.0
        %815 = vmatprep.subr.mxu0 0.0
        %816 = vmatpush1.msra.mxu0 0.0
        %817 = vmatprep.subr.mxu0 0.0
        %818 = vmatpush1.msra.mxu0 0.0
        %819 = vmatprep.subr.mxu0 0.0
        %820 = vmatpush1.msra.mxu0 0.0
        %821 = vmatprep.subr.mxu0 0.0
        %822 = vmatpush1.msra.mxu0 0.0
        %823 = vmatprep.subr.mxu0 0.0
        %824 = vmatpush1.msra.mxu0 0.0
        %825 = vmatprep.subr.mxu0 0.0
        %826 = vmatpush1.msra.mxu0 0.0
        %827 = vmatprep.subr.mxu0 0.0
        %828 = vmatpush1.msra.mxu0 0.0
        %829 = vmatprep.subr.mxu0 0.0
        %830 = vmatpush1.msra.mxu0 0.0
        %831 = vmatprep.subr.mxu0 0.0
        %832 = vmatpush1.msra.mxu0 0.0
        %833 = vmatprep.subr.mxu0 0.0
        %834 = vmatpush1.msra.mxu0 0.0
        %835 = vmatprep.subr.mxu0 0.0
        %836 = vmatpush1.msra.mxu0 0.0
        %837 = vmatprep.subr.mxu0 0.0
        %838 = vmatpush1.msra.mxu0 0.0
        %839 = vmatprep.subr.mxu0 0.0
        %840 = vmatpush1.msra.mxu0 0.0
        %841 = vmatprep.subr.mxu0 0.0
        %842 = vmatpush1.msra.mxu0 0.0
        %843 = vmatprep.subr.mxu0 0.0
        %844 = vmatpush1.msra.mxu0 0.0
        %845 = vmatprep.subr.mxu0 0.0
        %846 = vmatpush1.msra.mxu0 0.0
        %847 = vmatprep.subr.mxu0 0.0
        %848 = vmatpush1.msra.mxu0 0.0
        %849 = vmatprep.subr.mxu0 0.0
        %850 = vmatpush1.msra.mxu0 0.0
        %851 = vmatprep.mubr.f32.mxu0 0.0
        %v852 = vand.u32 %v784, 4294901760
        %v853 = vsub.f32 %v784, %v852
        %v854 = vand.u32 %v853, 4294901760
        %v855 = vsub.f32 %v853, %v854
        %v856 = vand.u32 %v855, 4294901760
        %857 = vmatmul.mubr.f32.gmra.mrb[0].mxu0 %v856
        %v858 = vpop.f32.mrb[0].mxu0
        %v859 = vadd.f32 0.0, %v858
        %v860 = vpop.f32.mrb[0].mxu0
        %861 = vdwg.mxu0
        %862 = vmatprep.subr.mxu0 0.0
        %v863 = vand.u32 %v317, 4294901760
        %v864 = vsub.f32 %v317, %v863
        %v865 = vand.u32 %v864, 4294901760
        %v866 = vsub.f32 %v864, %v865
        %v867 = vand.u32 %v866, 4294901760
        %868 = vmatpush1.msra.mxu0 %v867
        %869 = vmatprep.subr.mxu0 0.0
        %870 = vmatpush1.msra.mxu0 0.0
        %871 = vmatprep.subr.mxu0 0.0
        %872 = vmatpush1.msra.mxu0 0.0
        %873 = vmatprep.subr.mxu0 0.0
        %874 = vmatpush1.msra.mxu0 0.0
        %875 = vmatprep.subr.mxu0 0.0
        %876 = vmatpush1.msra.mxu0 0.0
        %877 = vmatprep.subr.mxu0 0.0
        %878 = vmatpush1.msra.mxu0 0.0
        %879 = vmatprep.subr.mxu0 0.0
        %880 = vmatpush1.msra.mxu0 0.0
        %881 = vmatprep.subr.mxu0 0.0
        %882 = vmatpush1.msra.mxu0 0.0
        %883 = vmatprep.subr.mxu0 0.0
        %884 = vmatpush1.msra.mxu0 0.0
        %885 = vmatprep.subr.mxu0 0.0
        %886 = vmatpush1.msra.mxu0 0.0
        %887 = vmatprep.subr.mxu0 0.0
        %888 = vmatpush1.msra.mxu0 0.0
        %889 = vmatprep.subr.mxu0 0.0
        %890 = vmatpush1.msra.mxu0 0.0
        %891 = vmatprep.subr.mxu0 0.0
        %892 = vmatpush1.msra.mxu0 0.0
        %893 = vmatprep.subr.mxu0 0.0
        %894 = vmatpush1.msra.mxu0 0.0
        %895 = vmatprep.subr.mxu0 0.0
        %896 = vmatpush1.msra.mxu0 0.0
        %897 = vmatprep.subr.mxu0 0.0
        %898 = vmatpush1.msra.mxu0 0.0
        %899 = vmatprep.subr.mxu0 0.0
        %900 = vmatpush1.msra.mxu0 0.0
        %901 = vmatprep.subr.mxu0 0.0
        %902 = vmatpush1.msra.mxu0 0.0
        %903 = vmatprep.subr.mxu0 0.0
        %904 = vmatpush1.msra.mxu0 0.0
        %905 = vmatprep.subr.mxu0 0.0
        %906 = vmatpush1.msra.mxu0 0.0
        %907 = vmatprep.subr.mxu0 0.0
        %908 = vmatpush1.msra.mxu0 0.0
        %909 = vmatprep.subr.mxu0 0.0
        %910 = vmatpush1.msra.mxu0 0.0
        %911 = vmatprep.subr.mxu0 0.0
        %912 = vmatpush1.msra.mxu0 0.0
        %913 = vmatprep.subr.mxu0 0.0
        %914 = vmatpush1.msra.mxu0 0.0
        %915 = vmatprep.subr.mxu0 0.0
        %916 = vmatpush1.msra.mxu0 0.0
        %917 = vmatprep.subr.mxu0 0.0
        %918 = vmatpush1.msra.mxu0 0.0
        %919 = vmatprep.subr.mxu0 0.0
        %920 = vmatpush1.msra.mxu0 0.0
        %921 = vmatprep.subr.mxu0 0.0
        %922 = vmatpush1.msra.mxu0 0.0
        %923 = vmatprep.subr.mxu0 0.0
        %924 = vmatpush1.msra.mxu0 0.0
        %925 = vmatprep.subr.mxu0 0.0
        %926 = vmatpush1.msra.mxu0 0.0
        %927 = vmatprep.subr.mxu0 0.0
        %928 = vmatpush1.msra.mxu0 0.0
        %929 = vmatprep.subr.mxu0 0.0
        %930 = vmatpush1.msra.mxu0 0.0
        %931 = vmatprep.mubr.f32.mxu0 0.0
        %v932 = vand.u32 %v784, 4294901760
        %933 = vmatmul.mubr.f32.gmra.mrb[0].mxu0 %v932
        %v934 = vpop.f32.mrb[0].mxu0
        %v935 = vadd.f32 %v859, %v934
        %v936 = vpop.f32.mrb[0].mxu0
        %937 = vdwg.mxu0
        %938 = vmatprep.subr.mxu0 0.0
        %v939 = vand.u32 %v317, 4294901760
        %v940 = vsub.f32 %v317, %v939
        %941 = vmatpush1.msra.mxu0 %v940
        %942 = vmatprep.subr.mxu0 0.0
        %943 = vmatpush1.msra.mxu0 0.0
        %944 = vmatprep.subr.mxu0 0.0
        %945 = vmatpush1.msra.mxu0 0.0
        %946 = vmatprep.subr.mxu0 0.0
        %947 = vmatpush1.msra.mxu0 0.0
        %948 = vmatprep.subr.mxu0 0.0
        %949 = vmatpush1.msra.mxu0 0.0
        %950 = vmatprep.subr.mxu0 0.0
        %951 = vmatpush1.msra.mxu0 0.0
        %952 = vmatprep.subr.mxu0 0.0
        %953 = vmatpush1.msra.mxu0 0.0
        %954 = vmatprep.subr.mxu0 0.0
        %955 = vmatpush1.msra.mxu0 0.0
        %956 = vmatprep.subr.mxu0 0.0
        %957 = vmatpush1.msra.mxu0 0.0
        %958 = vmatprep.subr.mxu0 0.0
        %959 = vmatpush1.msra.mxu0 0.0
        %960 = vmatprep.subr.mxu0 0.0
        %961 = vmatpush1.msra.mxu0 0.0
        %962 = vmatprep.subr.mxu0 0.0
        %963 = vmatpush1.msra.mxu0 0.0
        %964 = vmatprep.subr.mxu0 0.0
        %965 = vmatpush1.msra.mxu0 0.0
        %966 = vmatprep.subr.mxu0 0.0
        %967 = vmatpush1.msra.mxu0 0.0
        %968 = vmatprep.subr.mxu0 0.0
        %969 = vmatpush1.msra.mxu0 0.0
        %970 = vmatprep.subr.mxu0 0.0
        %971 = vmatpush1.msra.mxu0 0.0
        %972 = vmatprep.subr.mxu0 0.0
        %973 = vmatpush1.msra.mxu0 0.0
        %974 = vmatprep.subr.mxu0 0.0
        %975 = vmatpush1.msra.mxu0 0.0
        %976 = vmatprep.subr.mxu0 0.0
        %977 = vmatpush1.msra.mxu0 0.0
        %978 = vmatprep.subr.mxu0 0.0
        %979 = vmatpush1.msra.mxu0 0.0
        %980 = vmatprep.subr.mxu0 0.0
        %981 = vmatpush1.msra.mxu0 0.0
        %982 = vmatprep.subr.mxu0 0.0
        %983 = vmatpush1.msra.mxu0 0.0
        %984 = vmatprep.subr.mxu0 0.0
        %985 = vmatpush1.msra.mxu0 0.0
        %986 = vmatprep.subr.mxu0 0.0
        %987 = vmatpush1.msra.mxu0 0.0
        %988 = vmatprep.subr.mxu0 0.0
        %989 = vmatpush1.msra.mxu0 0.0
        %990 = vmatprep.subr.mxu0 0.0
        %991 = vmatpush1.msra.mxu0 0.0
        %992 = vmatprep.subr.mxu0 0.0
        %993 = vmatpush1.msra.mxu0 0.0
        %994 = vmatprep.subr.mxu0 0.0
        %995 = vmatpush1.msra.mxu0 0.0
        %996 = vmatprep.subr.mxu0 0.0
        %997 = vmatpush1.msra.mxu0 0.0
        %998 = vmatprep.subr.mxu0 0.0
        %999 = vmatpush1.msra.mxu0 0.0
        %1000 = vmatprep.subr.mxu0 0.0
        %1001 = vmatpush1.msra.mxu0 0.0
        %1002 = vmatprep.subr.mxu0 0.0
        %1003 = vmatpush1.msra.mxu0 0.0
        %1004 = vmatprep.mubr.f32.mxu0 0.0
        %v1005 = vand.u32 %v784, 4294901760
        %v1006 = vsub.f32 %v784, %v1005
        %1007 = vmatmul.mubr.f32.gmra.mrb[0].mxu0 %v1006
        %v1008 = vpop.f32.mrb[0].mxu0
        %v1009 = vadd.f32 %v935, %v1008
        %v1010 = vpop.f32.mrb[0].mxu0
        %1011 = vdwg.mxu0
        %1012 = vmatprep.subr.mxu0 0.0
        %v1013 = vand.u32 %v317, 4294901760
        %1014 = vmatpush1.msra.mxu0 %v1013
        %1015 = vmatprep.subr.mxu0 0.0
        %1016 = vmatpush1.msra.mxu0 0.0
        %1017 = vmatprep.subr.mxu0 0.0
        %1018 = vmatpush1.msra.mxu0 0.0
        %1019 = vmatprep.subr.mxu0 0.0
        %1020 = vmatpush1.msra.mxu0 0.0
        %1021 = vmatprep.subr.mxu0 0.0
        %1022 = vmatpush1.msra.mxu0 0.0
        %1023 = vmatprep.subr.mxu0 0.0
        %1024 = vmatpush1.msra.mxu0 0.0
        %1025 = vmatprep.subr.mxu0 0.0
        %1026 = vmatpush1.msra.mxu0 0.0
        %1027 = vmatprep.subr.mxu0 0.0
        %1028 = vmatpush1.msra.mxu0 0.0
        %1029 = vmatprep.subr.mxu0 0.0
        %1030 = vmatpush1.msra.mxu0 0.0
        %1031 = vmatprep.subr.mxu0 0.0
        %1032 = vmatpush1.msra.mxu0 0.0
        %1033 = vmatprep.subr.mxu0 0.0
        %1034 = vmatpush1.msra.mxu0 0.0
        %1035 = vmatprep.subr.mxu0 0.0
        %1036 = vmatpush1.msra.mxu0 0.0
        %1037 = vmatprep.subr.mxu0 0.0
        %1038 = vmatpush1.msra.mxu0 0.0
        %1039 = vmatprep.subr.mxu0 0.0
        %1040 = vmatpush1.msra.mxu0 0.0
        %1041 = vmatprep.subr.mxu0 0.0
        %1042 = vmatpush1.msra.mxu0 0.0
        %1043 = vmatprep.subr.mxu0 0.0
        %1044 = vmatpush1.msra.mxu0 0.0
        %1045 = vmatprep.subr.mxu0 0.0
        %1046 = vmatpush1.msra.mxu0 0.0
        %1047 = vmatprep.subr.mxu0 0.0
        %1048 = vmatpush1.msra.mxu0 0.0
        %1049 = vmatprep.subr.mxu0 0.0
        %1050 = vmatpush1.msra.mxu0 0.0
        %1051 = vmatprep.subr.mxu0 0.0
        %1052 = vmatpush1.msra.mxu0 0.0
        %1053 = vmatprep.subr.mxu0 0.0
        %1054 = vmatpush1.msra.mxu0 0.0
        %1055 = vmatprep.subr.mxu0 0.0
        %1056 = vmatpush1.msra.mxu0 0.0
        %1057 = vmatprep.subr.mxu0 0.0
        %1058 = vmatpush1.msra.mxu0 0.0
        %1059 = vmatprep.subr.mxu0 0.0
        %1060 = vmatpush1.msra.mxu0 0.0
        %1061 = vmatprep.subr.mxu0 0.0
        %1062 = vmatpush1.msra.mxu0 0.0
        %1063 = vmatprep.subr.mxu0 0.0
        %1064 = vmatpush1.msra.mxu0 0.0
        %1065 = vmatprep.subr.mxu0 0.0
        %1066 = vmatpush1.msra.mxu0 0.0
        %1067 = vmatprep.subr.mxu0 0.0
        %1068 = vmatpush1.msra.mxu0 0.0
        %1069 = vmatprep.subr.mxu0 0.0
        %1070 = vmatpush1.msra.mxu0 0.0
        %1071 = vmatprep.subr.mxu0 0.0
        %1072 = vmatpush1.msra.mxu0 0.0
        %1073 = vmatprep.subr.mxu0 0.0
        %1074 = vmatpush1.msra.mxu0 0.0
        %1075 = vmatprep.subr.mxu0 0.0
        %1076 = vmatpush1.msra.mxu0 0.0
        %1077 = vmatprep.mubr.f32.mxu0 0.0
        %v1078 = vand.u32 %v784, 4294901760
        %v1079 = vsub.f32 %v784, %v1078
        %v1080 = vand.u32 %v1079, 4294901760
        %1081 = vmatmul.mubr.f32.gmra.mrb[0].mxu0 %v1080
        %v1082 = vpop.f32.mrb[0].mxu0
        %v1083 = vadd.f32 %v1009, %v1082
        %v1084 = vpop.f32.mrb[0].mxu0
        %1085 = vdwg.mxu0
        %1086 = vmatprep.subr.mxu0 0.0
        %v1087 = vand.u32 %v317, 4294901760
        %v1088 = vsub.f32 %v317, %v1087
        %v1089 = vand.u32 %v1088, 4294901760
        %1090 = vmatpush1.msra.mxu0 %v1089
        %1091 = vmatprep.subr.mxu0 0.0
        %1092 = vmatpush1.msra.mxu0 0.0
        %1093 = vmatprep.subr.mxu0 0.0
        %1094 = vmatpush1.msra.mxu0 0.0
        %1095 = vmatprep.subr.mxu0 0.0
        %1096 = vmatpush1.msra.mxu0 0.0
        %1097 = vmatprep.subr.mxu0 0.0
        %1098 = vmatpush1.msra.mxu0 0.0
        %1099 = vmatprep.subr.mxu0 0.0
        %1100 = vmatpush1.msra.mxu0 0.0
        %1101 = vmatprep.subr.mxu0 0.0
        %1102 = vmatpush1.msra.mxu0 0.0
        %1103 = vmatprep.subr.mxu0 0.0
        %1104 = vmatpush1.msra.mxu0 0.0
        %1105 = vmatprep.subr.mxu0 0.0
        %1106 = vmatpush1.msra.mxu0 0.0
        %1107 = vmatprep.subr.mxu0 0.0
        %1108 = vmatpush1.msra.mxu0 0.0
        %1109 = vmatprep.subr.mxu0 0.0
        %1110 = vmatpush1.msra.mxu0 0.0
        %1111 = vmatprep.subr.mxu0 0.0
        %1112 = vmatpush1.msra.mxu0 0.0
        %1113 = vmatprep.subr.mxu0 0.0
        %1114 = vmatpush1.msra.mxu0 0.0
        %1115 = vmatprep.subr.mxu0 0.0
        %1116 = vmatpush1.msra.mxu0 0.0
        %1117 = vmatprep.subr.mxu0 0.0
        %1118 = vmatpush1.msra.mxu0 0.0
        %1119 = vmatprep.subr.mxu0 0.0
        %1120 = vmatpush1.msra.mxu0 0.0
        %1121 = vmatprep.subr.mxu0 0.0
        %1122 = vmatpush1.msra.mxu0 0.0
        %1123 = vmatprep.subr.mxu0 0.0
        %1124 = vmatpush1.msra.mxu0 0.0
        %1125 = vmatprep.subr.mxu0 0.0
        %1126 = vmatpush1.msra.mxu0 0.0
        %1127 = vmatprep.subr.mxu0 0.0
        %1128 = vmatpush1.msra.mxu0 0.0
        %1129 = vmatprep.subr.mxu0 0.0
        %1130 = vmatpush1.msra.mxu0 0.0
        %1131 = vmatprep.subr.mxu0 0.0
        %1132 = vmatpush1.msra.mxu0 0.0
        %1133 = vmatprep.subr.mxu0 0.0
        %1134 = vmatpush1.msra.mxu0 0.0
        %1135 = vmatprep.subr.mxu0 0.0
        %1136 = vmatpush1.msra.mxu0 0.0
        %1137 = vmatprep.subr.mxu0 0.0
        %1138 = vmatpush1.msra.mxu0 0.0
        %1139 = vmatprep.subr.mxu0 0.0
        %1140 = vmatpush1.msra.mxu0 0.0
        %1141 = vmatprep.subr.mxu0 0.0
        %1142 = vmatpush1.msra.mxu0 0.0
        %1143 = vmatprep.subr.mxu0 0.0
        %1144 = vmatpush1.msra.mxu0 0.0
        %1145 = vmatprep.subr.mxu0 0.0
        %1146 = vmatpush1.msra.mxu0 0.0
        %1147 = vmatprep.subr.mxu0 0.0
        %1148 = vmatpush1.msra.mxu0 0.0
        %1149 = vmatprep.subr.mxu0 0.0
        %1150 = vmatpush1.msra.mxu0 0.0
        %1151 = vmatprep.subr.mxu0 0.0
        %1152 = vmatpush1.msra.mxu0 0.0
        %1153 = vmatprep.mubr.f32.mxu0 0.0
        %v1154 = vand.u32 %v784, 4294901760
        %1155 = vmatmul.mubr.f32.gmra.mrb[0].mxu0 %v1154
        %v1156 = vpop.f32.mrb[0].mxu0
        %v1157 = vadd.f32 %v1083, %v1156
        %v1158 = vpop.f32.mrb[0].mxu0
        %1159 = vdwg.mxu0
        %1160 = vmatprep.subr.mxu0 0.0
        %v1161 = vand.u32 %v317, 4294901760
        %1162 = vmatpush1.msra.mxu0 %v1161
        %1163 = vmatprep.subr.mxu0 0.0
        %1164 = vmatpush1.msra.mxu0 0.0
        %1165 = vmatprep.subr.mxu0 0.0
        %1166 = vmatpush1.msra.mxu0 0.0
        %1167 = vmatprep.subr.mxu0 0.0
        %1168 = vmatpush1.msra.mxu0 0.0
        %1169 = vmatprep.subr.mxu0 0.0
        %1170 = vmatpush1.msra.mxu0 0.0
        %1171 = vmatprep.subr.mxu0 0.0
        %1172 = vmatpush1.msra.mxu0 0.0
        %1173 = vmatprep.subr.mxu0 0.0
        %1174 = vmatpush1.msra.mxu0 0.0
        %1175 = vmatprep.subr.mxu0 0.0
        %1176 = vmatpush1.msra.mxu0 0.0
        %1177 = vmatprep.subr.mxu0 0.0
        %1178 = vmatpush1.msra.mxu0 0.0
        %1179 = vmatprep.subr.mxu0 0.0
        %1180 = vmatpush1.msra.mxu0 0.0
        %1181 = vmatprep.subr.mxu0 0.0
        %1182 = vmatpush1.msra.mxu0 0.0
        %1183 = vmatprep.subr.mxu0 0.0
        %1184 = vmatpush1.msra.mxu0 0.0
        %1185 = vmatprep.subr.mxu0 0.0
        %1186 = vmatpush1.msra.mxu0 0.0
        %1187 = vmatprep.subr.mxu0 0.0
        %1188 = vmatpush1.msra.mxu0 0.0
        %1189 = vmatprep.subr.mxu0 0.0
        %1190 = vmatpush1.msra.mxu0 0.0
        %1191 = vmatprep.subr.mxu0 0.0
        %1192 = vmatpush1.msra.mxu0 0.0
        %1193 = vmatprep.subr.mxu0 0.0
        %1194 = vmatpush1.msra.mxu0 0.0
        %1195 = vmatprep.subr.mxu0 0.0
        %1196 = vmatpush1.msra.mxu0 0.0
        %1197 = vmatprep.subr.mxu0 0.0
        %1198 = vmatpush1.msra.mxu0 0.0
        %1199 = vmatprep.subr.mxu0 0.0
        %1200 = vmatpush1.msra.mxu0 0.0
        %1201 = vmatprep.subr.mxu0 0.0
        %1202 = vmatpush1.msra.mxu0 0.0
        %1203 = vmatprep.subr.mxu0 0.0
        %1204 = vmatpush1.msra.mxu0 0.0
        %1205 = vmatprep.subr.mxu0 0.0
        %1206 = vmatpush1.msra.mxu0 0.0
        %1207 = vmatprep.subr.mxu0 0.0
        %1208 = vmatpush1.msra.mxu0 0.0
        %1209 = vmatprep.subr.mxu0 0.0
        %1210 = vmatpush1.msra.mxu0 0.0
        %1211 = vmatprep.subr.mxu0 0.0
        %1212 = vmatpush1.msra.mxu0 0.0
        %1213 = vmatprep.subr.mxu0 0.0
        %1214 = vmatpush1.msra.mxu0 0.0
        %1215 = vmatprep.subr.mxu0 0.0
        %1216 = vmatpush1.msra.mxu0 0.0
        %1217 = vmatprep.subr.mxu0 0.0
        %1218 = vmatpush1.msra.mxu0 0.0
        %1219 = vmatprep.subr.mxu0 0.0
        %1220 = vmatpush1.msra.mxu0 0.0
        %1221 = vmatprep.subr.mxu0 0.0
        %1222 = vmatpush1.msra.mxu0 0.0
        %1223 = vmatprep.subr.mxu0 0.0
        %1224 = vmatpush1.msra.mxu0 0.0
        %1225 = vmatprep.mubr.f32.mxu0 0.0
        %v1226 = vand.u32 %v784, 4294901760
        %1227 = vmatmul.mubr.f32.gmra.mrb[0].mxu0 %v1226
        %v1228 = vpop.f32.mrb[0].mxu0
        %v1229 = vadd.f32 %v1157, %v1228
        %v1230 = vpop.f32.mrb[0].mxu0
        %1231 = vdwg.mxu0
        %1232 = vst.msk [vmem:[%s306] sm:$0xff] %vm318, %v1229
        %1233 = vst.msk [vmem:[%s313] sm:$0xff] %vm771, %v782
        %s1234 = sand.u32 %s130, 1
        %s1235 = scalar_lea.sflag [#allocation4], %s1234
        %s1236 = sand.u32 %s130, 1
        %s1237 = smul.addr %s1236, 8
        %s1238 = scalar_lea.vmem [#allocation8], %s1237
        %s1239 = sand.u32 %s158, 1
        %s1240 = scalar_lea.sflag [#allocation10], %s1239
        %s1241 = sand.u32 %s158, 1
        %s1242 = smul.addr %s1241, 8
        %s1243 = scalar_lea.vmem [#allocation9], %s1242
        // Predicated region
        $region45: #{tpu_custom_call.1} parent=31 // pred_check
          %p1244 = pneg %p140
        $region46: #{tpu_custom_call.1} parent=31 // pred_check_branch
          %1246 = sbr.rel (%p1244) target = $region48
        $region47: #{tpu_custom_call.1} parent=31 // pred_region
          %s1248 = ssub.s32 128, 128
          %1249 = vsyncadd %s1235, %s1248
          %s1250 = sadd.s32 %s33, %s32
          %s1251 = smul.addr %s1250, 128
          %s1252 = scalar_lea.hbm %s3, %s1251
          %s1254 = sshll.u32 %s1238, 4
          %s1255 = int_to_ptr.vmem [resolvable:$true] %s1254
          %1257 = dma.vmem_to_hbm [thread:$0]  %s1255, 128, %s1252, %s1235
        $region48: #{tpu_custom_call.1} parent=31 // pred_fallthru
          _
        // Predicated region
        $region49: #{tpu_custom_call.1} parent=31 // pred_check
          %p1258 = pneg %p168
        $region50: #{tpu_custom_call.1} parent=31 // pred_check_branch
          %1260 = sbr.rel (%p1258) target = $region52
        $region51: #{tpu_custom_call.1} parent=31 // pred_region
          %s1262 = ssub.s32 128, 128
          %1263 = vsyncadd %s1240, %s1262
          %s1264 = sadd.s32 %s33, %s32
          %s1265 = smul.addr %s1264, 128
          %s1266 = scalar_lea.hbm %s4, %s1265
          %s1268 = sshll.u32 %s1243, 4
          %s1269 = int_to_ptr.vmem [resolvable:$true] %s1268
          %1271 = dma.vmem_to_hbm [thread:$0]  %s1269, 128, %s1266, %s1240
        $region52: #{tpu_custom_call.1} parent=31 // pred_fallthru
          _
      $region32: #{tpu_custom_call.1} parent=5 // pred_fallthru
        _
      %p1272 = scmp.le.s32.totalorder 2, %s23
      // Predicated region
      $region53: #{tpu_custom_call.1} parent=5 // pred_check
        %p1273 = pneg %p1272
      $region54: #{tpu_custom_call.1} parent=5 // pred_check_branch
        %1275 = sbr.rel (%p1273) target = $region56
      $region55: #{tpu_custom_call.1} parent=5 // pred_region
        %s1276 = ssub.s32 %s23, 2
        // Predicated region
        $region57: #{tpu_custom_call.1} parent=55 // pred_check
          %p1277 = pneg %p146
        $region58: #{tpu_custom_call.1} parent=55 // pred_check_branch
          %1279 = sbr.rel (%p1277) target = $region60
        $region59: #{tpu_custom_call.1} parent=55 // pred_region
          %s1280 = sand.u32 %s131, 1
          %s1281 = scalar_lea.sflag [#allocation4], %s1280
          %s1282 = sand.u32 %s131, 1
          %s1283 = smul.addr %s1282, 8
          %s1284 = scalar_lea.vmem [#allocation8], %s1283
          %1285 = dma.done %s1281, 128
        $region60: #{tpu_custom_call.1} parent=55 // pred_fallthru
          _
        // Predicated region
        $region61: #{tpu_custom_call.1} parent=55 // pred_check
          %p1286 = pneg %p174
        $region62: #{tpu_custom_call.1} parent=55 // pred_check_branch
          %1288 = sbr.rel (%p1286) target = $region64
        $region63: #{tpu_custom_call.1} parent=55 // pred_region
          %s1289 = sand.u32 %s159, 1
          %s1290 = scalar_lea.sflag [#allocation10], %s1289
          %s1291 = sand.u32 %s159, 1
          %s1292 = smul.addr %s1291, 8
          %s1293 = scalar_lea.vmem [#allocation9], %s1292
          %1294 = dma.done %s1290, 128
        $region64: #{tpu_custom_call.1} parent=55 // pred_fallthru
          _
      $region56: #{tpu_custom_call.1} parent=5 // pred_fallthru
        _
    $region6: #{tpu_custom_call.1} parent=1 // loop_footer
      %s27 = sadd.s32 1, %s23
    $region7: #{tpu_custom_call.1} parent=1 // loop_footer_branch
      %22 = sbr.rel target = $region3
    $region8: #{tpu_custom_call.1} parent=1 // loop_exit
      _
    %1295 = vsyncpa [#allocation3], 1
    %s1296 = scalar_lea.sflag [#allocation3], 1
    %1297 = vsyncpa %s1296, 1
    %1298 = vsyncpa [#allocation6], 1
    %s1299 = scalar_lea.sflag [#allocation6], 1
    %1300 = vsyncpa %s1299, 1
    %1301 = vsyncpa [#allocation4], 1
    %s1302 = scalar_lea.sflag [#allocation4], 1
    %1303 = vsyncpa %s1302, 1
    %1304 = vsyncpa [#allocation10], 1
    %s1305 = scalar_lea.sflag [#allocation10], 1
    %1306 = vsyncpa %s1305, 1

</llo_original>
